<compile_context>
chip_gen: v7x
topology: tpu7x:2x2x1
jax: 0.10.0
libtpu: 0.0.40
codegen_flags: <defaults>
</compile_context>

<pallas_src>
import functools

import jax
import jax.numpy as jnp
from jax.experimental import pallas as pl
from jax.experimental.pallas import tpu as pltpu

_LANE = 128
_SUBLANE = 8


def _round_up(x, m):
    return ((x + m - 1) // m) * m


def _vmem_budget_and_limit():
    """Generation-aware pipelined working-set budget and scoped-VMEM limit."""
    try:
        cap = int(pltpu.get_tpu_info().vmem_capacity_bytes)
    except Exception:
        cap = 64 * 1024 * 1024          # conservative fallback: v7x per-core VMEM
    budget = (cap * 2) // 5             # ~40% of VMEM for the working set
    limit = (cap * 3) // 4              # scoped-VMEM ceiling with headroom
    return budget, limit


def _pick_tile_d(d, cap_cols):
    """Lane-dense feature tile.

    Returns (tile_d, grid_d).  tile_d is a multiple of 128 that evenly divides
    cdiv(d,128)*128 (or the full d when d <= 128), capped by cap_cols.  We
    prefer >= 2 feature blocks so the "parallel" grid axis can be sharded
    across both TensorCores on v7x (one extra grid step on v5e/v6e).
    """
    if d <= _LANE:
        return d, 1
    d_lane = _round_up(d, _LANE)
    n_lane_blocks = d_lane // _LANE
    cap_blocks = max(int(cap_cols) // _LANE, 1)
    nb_min = 2 if n_lane_blocks >= 2 else 1
    nb0 = max(pl.cdiv(n_lane_blocks, cap_blocks), nb_min)
    nb = next((k for k in range(nb0, n_lane_blocks + 1)
               if n_lane_blocks % k == 0), n_lane_blocks)
    tile_d = d_lane // nb
    return tile_d, pl.cdiv(d, tile_d)


# ---------------------------------------------------------------------------
# Fused single-pass kernel (whole batch resident per feature tile).
# ---------------------------------------------------------------------------
def _bn1d_fused_kernel(x_ref, gamma_ref, beta_ref, rmean_ref, rvar_ref,
                       out_ref, new_rmean_ref, new_rvar_ref,
                       *, n, eps, momentum):
    # x tile: [N, TILE_D] -- batch on sublanes, features on lanes.
    x = x_ref[...].astype(jnp.float32)

    mean = jnp.sum(x, axis=0, keepdims=True) * jnp.float32(1.0 / n)   # [1, TILE_D]
    xm = x - mean
    # Two-pass, UNBIASED variance (torch.var default), as the module uses.
    # x is VMEM-resident, so this costs no extra HBM traffic and avoids
    # E[x^2]-E[x]^2 cancellation.
    var = jnp.sum(xm * xm, axis=0, keepdims=True) * jnp.float32(1.0 / max(n - 1, 1))

    inv_std = jax.lax.rsqrt(var + jnp.float32(eps))
    scale = gamma_ref[...] * inv_std                    # fold affine -> 2 VALU ops/elem
    out_ref[...] = (xm * scale + beta_ref[...]).astype(out_ref.dtype)

    m = jnp.float32(momentum)
    new_rmean_ref[...] = (1.0 - m) * rmean_ref[...] + m * mean
    new_rvar_ref[...] = (1.0 - m) * rvar_ref[...] + m * var


# ---------------------------------------------------------------------------
# Large-N fallback: stats accumulation pass + streaming normalize pass.
# ---------------------------------------------------------------------------
def _bn1d_stats_kernel(x_ref, sum_ref, sumsq_ref, *, n, tile_n, mask_rows):
    i = pl.program_id(1)                      # trailing "arbitrary" N axis

    @pl.when(i == 0)
    def _():
        sum_ref[...] = jnp.zeros_like(sum_ref)
        sumsq_ref[...] = jnp.zeros_like(sumsq_ref)

    x = x_ref[...].astype(jnp.float32)
    if mask_rows:
        # Ragged last N-block: zero the out-of-range rows so they don't
        # contaminate the column sums.
        row = jax.lax.broadcasted_iota(jnp.int32, x.shape, 0) + i * tile_n
        x = jnp.where(row < n, x, 0.0)
    sum_ref[...] += jnp.sum(x, axis=0, keepdims=True)
    sumsq_ref[...] += jnp.sum(x * x, axis=0, keepdims=True)


def _bn1d_apply_kernel(x_ref, scale_ref, shift_ref, out_ref):
    out_ref[...] = (x_ref[...].astype(jnp.float32) * scale_ref[...]
                    + shift_ref[...]).astype(out_ref.dtype)


def _batchnorm1d_2d_two_pass(x, gamma2, beta2, rmean2, rvar2, eps, momentum,
                             budget, vmem_limit):
    n, d = x.shape
    itemsize = jnp.dtype(x.dtype).itemsize

    tile_n = min(_round_up(n, _SUBLANE), 1024)
    bytes_per_elem = 4 * itemsize + 8         # dbl-buffered in/out + f32 temps
    cap_cols = max(budget // (tile_n * bytes_per_elem), _LANE)
    tile_d, grid_d = _pick_tile_d(d, cap_cols)
    grid_n = pl.cdiv(n, tile_n)

    # Pass 1: per-feature sum / sum-of-squares accumulated over the N axis.
    x_spec = pl.BlockSpec((tile_n, tile_d), lambda j, i: (i, j))
    vec_spec = pl.BlockSpec((1, tile_d), lambda j, i: (0, j))
    stats_kernel = functools.partial(
        _bn1d_stats_kernel, n=n, tile_n=tile_n, mask_rows=(n % tile_n != 0))
    s, s2 = pl.pallas_call(
        stats_kernel,
        out_shape=(jax.ShapeDtypeStruct((1, d), jnp.float32),
                   jax.ShapeDtypeStruct((1, d), jnp.float32)),
        grid=(grid_d, grid_n),
        in_specs=[x_spec],
        out_specs=(vec_spec, vec_spec),
        compiler_params=pltpu.CompilerParams(
            dimension_semantics=("parallel", "arbitrary"),
            vmem_limit_bytes=vmem_limit),
    )(x)

    # Tiny [1, D] math: plain JAX (negligible traffic).  One-pass variance
    # here can lose precision when |mean| >> std; clamped at 0 before rsqrt.
    mean = s * (1.0 / n)
    var = jnp.maximum((s2 - s * mean) * (1.0 / max(n - 1, 1)), 0.0)
    inv_std = jax.lax.rsqrt(var + jnp.float32(eps))
    scale = gamma2 * inv_std
    shift = beta2 - mean * scale

    # Pass 2: streaming normalize.
    x_spec2 = pl.BlockSpec((tile_n, tile_d), lambda i, j: (i, j))
    vec_spec2 = pl.BlockSpec((1, tile_d), lambda i, j: (0, j))
    out = pl.pallas_call(
        _bn1d_apply_kernel,
        out_shape=jax.ShapeDtypeStruct((n, d), x.dtype),
        grid=(grid_n, grid_d),
        in_specs=[x_spec2, vec_spec2, vec_spec2],
        out_specs=x_spec2,
        compiler_params=pltpu.CompilerParams(
            dimension_semantics=("parallel", "parallel"),
            vmem_limit_bytes=vmem_limit),
    )(x, scale, shift)

    m = jnp.float32(momentum)
    new_rmean = (1.0 - m) * rmean2 + m * mean
    new_rvar = (1.0 - m) * rvar2 + m * var
    return out, new_rmean, new_rvar


# ---------------------------------------------------------------------------
# 2-D wrapper.
# ---------------------------------------------------------------------------
def _batchnorm1d_2d(x, gamma, beta, running_mean, running_var, eps, momentum,
                    force_two_pass=False):
    n, d = x.shape
    itemsize = jnp.dtype(x.dtype).itemsize
    budget, vmem_limit = _vmem_budget_and_limit()

    gamma2 = gamma.reshape(1, d).astype(jnp.float32)
    beta2 = beta.reshape(1, d).astype(jnp.float32)
    rmean2 = running_mean.reshape(1, d).astype(jnp.float32)
    rvar2 = running_var.reshape(1, d).astype(jnp.float32)

    # Honest per-element VMEM footprint of the fused path: double-buffered
    # in + out blocks in the HBM dtype plus ~3 live f32 temporaries
    # (x upcast, x - mean, squared term).
    bytes_per_elem = 4 * itemsize + 12
    min_block_cols = max(min(d, _LANE), 1)
    fused_fits = n * min_block_cols * bytes_per_elem <= budget

    if force_two_pass or not fused_fits:
        return _batchnorm1d_2d_two_pass(x, gamma2, beta2, rmean2, rvar2,
                                        eps, momentum, budget, vmem_limit)

    cap_cols = budget // (n * bytes_per_elem)
    tile_d, grid_d = _pick_tile_d(d, cap_cols)

    mat_spec = pl.BlockSpec((n, tile_d), lambda j: (0, j))
    vec_spec = pl.BlockSpec((1, tile_d), lambda j: (0, j))
    kernel = functools.partial(_bn1d_fused_kernel, n=n, eps=float(eps),
                               momentum=float(momentum))

    out, new_rmean, new_rvar = pl.pallas_call(
        kernel,
        out_shape=(
            jax.ShapeDtypeStruct((n, d), x.dtype),
            jax.ShapeDtypeStruct((1, d), jnp.float32),
            jax.ShapeDtypeStruct((1, d), jnp.float32),
        ),
        grid=(grid_d,),
        in_specs=[mat_spec, vec_spec, vec_spec, vec_spec, vec_spec],
        out_specs=(mat_spec, vec_spec, vec_spec),
        compiler_params=pltpu.CompilerParams(
            dimension_semantics=("parallel",),     # shards feature blocks on v7x
            vmem_limit_bytes=vmem_limit),
    )(x, gamma2, beta2, rmean2, rvar2)
    return out, new_rmean, new_rvar


def batchnorm1d(x, gamma, beta, running_mean, running_var,
                eps=1e-5, momentum=0.1, _force_two_pass=False):
    """Training-mode forward of the custom BatchNorm1d module.

    x: [N, D] or [B, T, D].  Returns (out, new_running_mean, new_running_var)
    with running stats in the module's keepdim shapes ([1, D] / [1, 1, D]).
    """
    if x.ndim == 2:
        return _batchnorm1d_2d(x, gamma, beta, running_mean, running_var,
                               eps, momentum, force_two_pass=_force_two_pass)
    elif x.ndim == 3:
        b, t, d = x.shape
        out, nrm, nrv = _batchnorm1d_2d(
            x.reshape(b * t, d), gamma, beta, running_mean, running_var,
            eps, momentum, force_two_pass=_force_two_pass)
        return out.reshape(b, t, d), nrm.reshape(1, 1, d), nrv.reshape(1, 1, d)
    else:
        raise ValueError("BatchNorm1d expects 2-D or 3-D input")


if __name__ == "__main__":
    key = jax.random.PRNGKey(0)
    EPS, MOM = 1e-5, 0.1

    def reference(x, gamma, beta, rmean, rvar):
        axes = (0,) if x.ndim == 2 else (0, 1)
        xmean = x.mean(axis=axes, keepdims=True)
        xvar = x.var(axis=axes, keepdims=True, ddof=1)   # torch.var default
        out = gamma * (x - xmean) / jnp.sqrt(xvar + EPS) + beta
        new_rmean = (1.0 - MOM) * rmean + MOM * xmean
        new_rvar = (1.0 - MOM) * rvar + MOM * xvar
        return out, new_rmean, new_rvar

    def check(tag, got, want):
        for g, w in zip(got, want):
            assert jnp.allclose(g.reshape(w.shape), w, atol=1e-4, rtol=1e-4), \
                f"{tag} mismatch"

    # Case 1: 2-D input, lane-dense D (exercises the >=2-block feature grid).
    k1, key = jax.random.split(key)
    N, D = 32, 256
    x = jax.random.normal(k1, (N, D), dtype=jnp.float32)
    gamma = jnp.ones((D,), jnp.float32)
    beta = jnp.zeros((D,), jnp.float32)
    rmean = jnp.zeros((D,), jnp.float32)
    rvar = jnp.ones((D,), jnp.float32)
    res = batchnorm1d(x, gamma, beta, rmean, rvar, EPS, MOM)
    jax.block_until_ready(res)
    check("case1", res, reference(x, gamma, beta, rmean, rvar))

    # Case 2: 2-D input, small D < 128 (full-dim block, no padding at all).
    k1, k2, k3, k4, k5, key = jax.random.split(key, 6)
    N, D = 8, 40
    x = jax.random.normal(k1, (N, D), dtype=jnp.float32)
    gamma = jax.random.normal(k2, (D,), jnp.float32)
    beta = jax.random.normal(k3, (D,), jnp.float32)
    rmean = jax.random.normal(k4, (D,), jnp.float32)
    rvar = jax.random.uniform(k5, (D,), jnp.float32, 0.5, 1.5)
    res = batchnorm1d(x, gamma, beta, rmean, rvar, EPS, MOM)
    jax.block_until_ready(res)
    check("case2", res, reference(x, gamma, beta, rmean, rvar))

    # Case 3: 3-D input (reduce over dims (0, 1)).
    k1, key = jax.random.split(key)
    B, T, D = 4, 8, 40
    x3 = jax.random.normal(k1, (B, T, D), dtype=jnp.float32)
    gamma = jnp.ones((D,), jnp.float32)
    beta = jnp.zeros((D,), jnp.float32)
    rmean = jnp.zeros((D,), jnp.float32)
    rvar = jnp.ones((D,), jnp.float32)
    res = batchnorm1d(x3, gamma, beta, rmean, rvar, EPS, MOM)
    jax.block_until_ready(res)
    check("case3", res, reference(x3, gamma, beta, rmean, rvar))

    # Case 4: large-N fallback path (forced), ragged N-blocks and ragged D.
    k1, k2, k3, key = jax.random.split(key, 4)
    N, D = 1037, 200
    x = jax.random.normal(k1, (N, D), dtype=jnp.float32)
    gamma = jax.random.normal(k2, (D,), jnp.float32)
    beta = jax.random.normal(k3, (D,), jnp.float32)
    rmean = jnp.zeros((D,), jnp.float32)
    rvar = jnp.ones((D,), jnp.float32)
    res = batchnorm1d(x, gamma, beta, rmean, rvar, EPS, MOM,
                      _force_two_pass=True)
    jax.block_until_ready(res)
    check("case4", res, reference(x, gamma, beta, rmean, rvar))

    print("KERNEL_OK")
</pallas_src>

<mosaic_0001>
module attributes {stable_mosaic.version = 11 : i64} {
  func.func @_bn1d_fused_kernel(%arg0: i32, %arg1: memref<32x128xf32, #tpu.memory_space<vmem>>, %arg2: memref<1x128xf32, #tpu.memory_space<vmem>>, %arg3: memref<1x128xf32, #tpu.memory_space<vmem>>, %arg4: memref<1x128xf32, #tpu.memory_space<vmem>>, %arg5: memref<1x128xf32, #tpu.memory_space<vmem>>, %arg6: memref<32x128xf32, #tpu.memory_space<vmem>>, %arg7: memref<1x128xf32, #tpu.memory_space<vmem>>, %arg8: memref<1x128xf32, #tpu.memory_space<vmem>>) attributes {dimension_semantics = [#tpu.dimension_semantics<parallel>], iteration_bounds = array<i64: 2>, scalar_prefetch = 0 : i64, scratch_operands = 0 : i64, tpu.core_type = #tpu.core_type<tc>, window_params = [{transform_indices = @transform_0, window_bounds = array<i64: 32, 128>}, {transform_indices = @transform_1, window_bounds = array<i64: 1, 128>}, {transform_indices = @transform_2, window_bounds = array<i64: 1, 128>}, {transform_indices = @transform_3, window_bounds = array<i64: 1, 128>}, {transform_indices = @transform_4, window_bounds = array<i64: 1, 128>}, {transform_indices = @transform_5, window_bounds = array<i64: 32, 128>}, {transform_indices = @transform_6, window_bounds = array<i64: 1, 128>}, {transform_indices = @transform_7, window_bounds = array<i64: 1, 128>}]} {
    %c0 = arith.constant 0 : index
    %c0_0 = arith.constant 0 : index
    %0 = vector.load %arg1[%c0, %c0_0] : memref<32x128xf32, #tpu.memory_space<vmem>>, vector<32x128xf32>
    %cst = arith.constant dense<0.000000e+00> : vector<128xf32>
    %1 = vector.multi_reduction <add>, %0, %cst [0] : vector<32x128xf32> to vector<128xf32>
    %2 = vector.shape_cast %1 : vector<128xf32> to vector<1x128xf32>
    %cst_1 = arith.constant 3.125000e-02 : f32
    %3 = vector.broadcast %cst_1 : f32 to vector<1x128xf32>
    %4 = arith.mulf %2, %3 : vector<1x128xf32>
    %5 = vector.broadcast %4 : vector<1x128xf32> to vector<32x128xf32>
    %6 = arith.subf %0, %5 : vector<32x128xf32>
    %7 = arith.mulf %6, %6 : vector<32x128xf32>
    %cst_2 = arith.constant dense<0.000000e+00> : vector<128xf32>
    %8 = vector.multi_reduction <add>, %7, %cst_2 [0] : vector<32x128xf32> to vector<128xf32>
    %9 = vector.shape_cast %8 : vector<128xf32> to vector<1x128xf32>
    %cst_3 = arith.constant 0.0322580636 : f32
    %10 = vector.broadcast %cst_3 : f32 to vector<1x128xf32>
    %11 = arith.mulf %9, %10 : vector<1x128xf32>
    %cst_4 = arith.constant 9.99999974E-6 : f32
    %12 = vector.broadcast %cst_4 : f32 to vector<1x128xf32>
    %13 = arith.addf %11, %12 : vector<1x128xf32>
    %14 = math.rsqrt %13 : vector<1x128xf32>
    %c0_5 = arith.constant 0 : index
    %c0_6 = arith.constant 0 : index
    %15 = vector.load %arg2[%c0_5, %c0_6] : memref<1x128xf32, #tpu.memory_space<vmem>>, vector<1x128xf32>
    %16 = arith.mulf %15, %14 : vector<1x128xf32>
    %17 = vector.broadcast %16 : vector<1x128xf32> to vector<32x128xf32>
    %18 = arith.mulf %6, %17 : vector<32x128xf32>
    %c0_7 = arith.constant 0 : index
    %c0_8 = arith.constant 0 : index
    %19 = vector.load %arg3[%c0_7, %c0_8] : memref<1x128xf32, #tpu.memory_space<vmem>>, vector<1x128xf32>
    %20 = vector.broadcast %19 : vector<1x128xf32> to vector<32x128xf32>
    %21 = arith.addf %18, %20 : vector<32x128xf32>
    %c0_9 = arith.constant 0 : index
    %c0_10 = arith.constant 0 : index
    %22 = vector.load %arg6[%c0_9, %c0_10] : memref<32x128xf32, #tpu.memory_space<vmem>>, vector<32x128xf32>
    tpu.vector_store %arg6[%c0_9, %c0_10], %21 {strides = array<i32>} : memref<32x128xf32, #tpu.memory_space<vmem>>, vector<32x128xf32>,
    %cst_11 = arith.constant 1.000000e+00 : f32
    %cst_12 = arith.constant 1.000000e-01 : f32
    %23 = arith.subf %cst_11, %cst_12 : f32
    %c0_13 = arith.constant 0 : index
    %c0_14 = arith.constant 0 : index
    %24 = vector.load %arg4[%c0_13, %c0_14] : memref<1x128xf32, #tpu.memory_space<vmem>>, vector<1x128xf32>
    %25 = vector.broadcast %23 : f32 to vector<1x128xf32>
    %26 = arith.mulf %25, %24 : vector<1x128xf32>
    %cst_15 = arith.constant 1.000000e-01 : f32
    %27 = vector.broadcast %cst_15 : f32 to vector<1x128xf32>
    %28 = arith.mulf %27, %4 : vector<1x128xf32>
    %29 = arith.addf %26, %28 : vector<1x128xf32>
    %c0_16 = arith.constant 0 : index
    %c0_17 = arith.constant 0 : index
    %30 = vector.load %arg7[%c0_16, %c0_17] : memref<1x128xf32, #tpu.memory_space<vmem>>, vector<1x128xf32>
    tpu.vector_store %arg7[%c0_16, %c0_17], %29 {strides = array<i32>} : memref<1x128xf32, #tpu.memory_space<vmem>>, vector<1x128xf32>,
    %cst_18 = arith.constant 1.000000e+00 : f32
    %cst_19 = arith.constant 1.000000e-01 : f32
    %31 = arith.subf %cst_18, %cst_19 : f32
    %c0_20 = arith.constant 0 : index
    %c0_21 = arith.constant 0 : index
    %32 = vector.load %arg5[%c0_20, %c0_21] : memref<1x128xf32, #tpu.memory_space<vmem>>, vector<1x128xf32>
    %33 = vector.broadcast %31 : f32 to vector<1x128xf32>
    %34 = arith.mulf %33, %32 : vector<1x128xf32>
    %cst_22 = arith.constant 1.000000e-01 : f32
    %35 = vector.broadcast %cst_22 : f32 to vector<1x128xf32>
    %36 = arith.mulf %35, %11 : vector<1x128xf32>
    %37 = arith.addf %34, %36 : vector<1x128xf32>
    %c0_23 = arith.constant 0 : index
    %c0_24 = arith.constant 0 : index
    %38 = vector.load %arg8[%c0_23, %c0_24] : memref<1x128xf32, #tpu.memory_space<vmem>>, vector<1x128xf32>
    tpu.vector_store %arg8[%c0_23, %c0_24], %37 {strides = array<i32>} : memref<1x128xf32, #tpu.memory_space<vmem>>, vector<1x128xf32>,
    return
  }
  func.func @transform_0(%arg0: i32) -> (i32, i32) {
    %c0_i32 = arith.constant 0 : i32
    %c0_i32_0 = arith.constant 0 : i32
    return %c0_i32, %arg0 : i32, i32
  }
  func.func @transform_1(%arg0: i32) -> (i32, i32) {
    %c0_i32 = arith.constant 0 : i32
    %c0_i32_0 = arith.constant 0 : i32
    return %c0_i32, %arg0 : i32, i32
  }
  func.func @transform_2(%arg0: i32) -> (i32, i32) {
    %c0_i32 = arith.constant 0 : i32
    %c0_i32_0 = arith.constant 0 : i32
    return %c0_i32, %arg0 : i32, i32
  }
  func.func @transform_3(%arg0: i32) -> (i32, i32) {
    %c0_i32 = arith.constant 0 : i32
    %c0_i32_0 = arith.constant 0 : i32
    return %c0_i32, %arg0 : i32, i32
  }
  func.func @transform_4(%arg0: i32) -> (i32, i32) {
    %c0_i32 = arith.constant 0 : i32
    %c0_i32_0 = arith.constant 0 : i32
    return %c0_i32, %arg0 : i32, i32
  }
  func.func @transform_5(%arg0: i32) -> (i32, i32) {
    %c0_i32 = arith.constant 0 : i32
    %c0_i32_0 = arith.constant 0 : i32
    return %c0_i32, %arg0 : i32, i32
  }
  func.func @transform_6(%arg0: i32) -> (i32, i32) {
    %c0_i32 = arith.constant 0 : i32
    %c0_i32_0 = arith.constant 0 : i32
    return %c0_i32, %arg0 : i32, i32
  }
  func.func @transform_7(%arg0: i32) -> (i32, i32) {
    %c0_i32 = arith.constant 0 : i32
    %c0_i32_0 = arith.constant 0 : i32
    return %c0_i32, %arg0 : i32, i32
  }
}

</mosaic_0001>

<llo_original>
// kernel: tpu_custom_call.1
$region0: #{tpu_custom_call.1}
  #allocation0 [shape = 'u32[]', space=smem, size = 0x4, offset = 0x4, fixed_abs, tag = 'smem constant byte address 0x4 - core index']
  #allocation1 [shape = 'u32[144,128]{1,0:T(1,128)}', space=vmem, size = 0x12000, scoped, tag = 'internal scratch']
  %s0 = inlined_call_operand.hbm [shape: f32[32,256], index: 0, kind: input, shape index: {}]
  %s1 = inlined_call_operand.vmem [shape: f32[1,256], index: 1, kind: input, shape index: {}]
  %s2 = inlined_call_operand.vmem [shape: f32[1,256], index: 2, kind: input, shape index: {}]
  %s3 = inlined_call_operand.vmem [shape: f32[1,256], index: 3, kind: input, shape index: {}]
  %s4 = inlined_call_operand.vmem [shape: f32[1,256], index: 4, kind: input, shape index: {}]
  %s5 = inlined_call_operand.hbm [shape: f32[32,256], index: 5, kind: output, shape index: {0}]
  %s6 = inlined_call_operand.hbm [shape: f32[1,256], index: 6, kind: output, shape index: {1}]
  %s7 = inlined_call_operand.hbm [shape: f32[1,256], index: 7, kind: output, shape index: {2}]
  %8 = xla_tuple %s5, %s6, %s7
  %s9 = sld [smem:[#allocation0]]
  $region73: #{tpu_custom_call.1} parent=0
    _
  %s11 = ssub.s32 1, %s9
  %s12 = scalar_select 0, %s11, %s9
  $region1: #{tpu_custom_call.1} parent=0
    #allocation2 [shape = 'u8[32768]{0}', space=vmem, size = 0x8000, scoped, tag = 'input window, operand 0']
    #allocation3 [shape = 's32[2]{0}', space=sflag, size = 0x8, scoped, tag = 'scoped memory for tpu_custom_call.1']
    #allocation4 [shape = 's32[2]{0}', space=sflag, size = 0x8, scoped, tag = 'scoped memory for tpu_custom_call.1']
    #allocation5 [shape = 'u8[32768]{0}', space=vmem, size = 0x8000, scoped, tag = 'output window, operand 0']
    #allocation6 [shape = 'u8[1024]{0}', space=vmem, size = 0x400, scoped, tag = 'output window, operand 1']
    #allocation7 [shape = 's32[2]{0}', space=sflag, size = 0x8, scoped, tag = 'scoped memory for tpu_custom_call.1']
    #allocation8 [shape = 'u8[1024]{0}', space=vmem, size = 0x400, scoped, tag = 'output window, operand 2']
    %13 = vsyncpa [#allocation3], 0
    %s14 = scalar_lea.sflag [#allocation3], 1
    %15 = vsyncpa %s14, 0
    %16 = vsyncpa [#allocation4], 0
    %s17 = scalar_lea.sflag [#allocation4], 1
    %18 = vsyncpa %s17, 0
    %19 = vsyncpa [#allocation7], 0
    %s20 = scalar_lea.sflag [#allocation7], 1
    %21 = vsyncpa %s20, 0
    loop: start=0, step=1, limit=4
    $region2: #{tpu_custom_call.1} parent=1 // loop_pre_header
      _
    $region3: #{tpu_custom_call.1} parent=1 // loop_header
      %s23 = sphi 0, %s27
      %p24 = scmp.ge.s32.totalorder %s23, 4
      %s33 = sphi 0, %s35
      %s36 = sphi 0, %s33
      %s37 = sphi 0, %s36
      %s53 = sphi 0, %s37
      %s59 = sphi 0, %s61
      %s62 = sphi 0, %s59
      %s63 = sphi 0, %s62
      %s79 = sphi 0, %s63
      %s85 = sphi 0, %s87
      %s88 = sphi 0, %s85
      %s89 = sphi 0, %s88
      %s105 = sphi 0, %s89
      %s111 = sphi 0, %s113
      %s114 = sphi 0, %s111
      %s115 = sphi 0, %s114
      %s131 = sphi 0, %s115
      %s137 = sphi 0, %s139
      %s140 = sphi 0, %s137
      %s141 = sphi 0, %s140
      %s157 = sphi 0, %s141
      %s163 = sphi 0, %s165
      %s166 = sphi 0, %s163
      %s167 = sphi 0, %s166
      %s183 = sphi 0, %s167
      %s189 = sphi 0, %s191
      %s192 = sphi 0, %s189
      %s193 = sphi 0, %s192
      %s209 = sphi 0, %s193
      %s215 = sphi 0, %s217
      %s218 = sphi 0, %s215
      %s219 = sphi 0, %s218
      %s235 = sphi 0, %s219
    $region4: #{tpu_custom_call.1} parent=1 // loop_header_branch
      %26 = sbr.rel (%p24) target = $region8
    $region5: #{tpu_custom_call.1} parent=1 // loop_body
      %s28 = ssub.s32 %s23, 1
      %s29 = ssub.s32 %s23, 2
      %s30 = sadd.s32 %s23, 1
      %s31 = ssub.s32 %s23, %s30
      %p32 = scmp.eq.s32.totalorder %s31, 0
      %s34 = sadd.s32 %s33, 1
      %s35 = scalar_select %p32, %s33, %s34
      %p38 = pneg %p32
      %p39 = scmp.eq.s32.totalorder %s23, 1
      %p40 = por %p38, %p39
      %p41 = scmp.ne.s32.totalorder %s33, %s36
      %p42 = scmp.eq.s32.totalorder %s23, 0
      %p43 = por %p41, %p42
      %p44 = scmp.ne.s32.totalorder %s33, %s36
      %p45 = scmp.eq.s32.totalorder %s28, 1
      %p46 = por %p44, %p45
      %p47 = scmp.ne.s32.totalorder %s36, %s37
      %p48 = scmp.eq.s32.totalorder %s28, 0
      %p49 = por %p47, %p48
      %p50 = scmp.ne.s32.totalorder %s36, %s37
      %p51 = scmp.eq.s32.totalorder %s29, 1
      %p52 = por %p50, %p51
      %p54 = scmp.ne.s32.totalorder %s37, %s53
      %p55 = scmp.eq.s32.totalorder %s29, 0
      %p56 = por %p54, %p55
      %s57 = ssub.s32 %s23, %s30
      %p58 = scmp.eq.s32.totalorder %s57, 0
      %s60 = sadd.s32 %s59, 1
      %s61 = scalar_select %p58, %s59, %s60
      %p64 = pneg %p58
      %p65 = scmp.eq.s32.totalorder %s23, 1
      %p66 = por %p64, %p65
      %p67 = scmp.ne.s32.totalorder %s59, %s62
      %p68 = scmp.eq.s32.totalorder %s23, 0
      %p69 = por %p67, %p68
      %p70 = scmp.ne.s32.totalorder %s59, %s62
      %p71 = scmp.eq.s32.totalorder %s28, 1
      %p72 = por %p70, %p71
      %p73 = scmp.ne.s32.totalorder %s62, %s63
      %p74 = scmp.eq.s32.totalorder %s28, 0
      %p75 = por %p73, %p74
      %p76 = scmp.ne.s32.totalorder %s62, %s63
      %p77 = scmp.eq.s32.totalorder %s29, 1
      %p78 = por %p76, %p77
      %p80 = scmp.ne.s32.totalorder %s63, %s79
      %p81 = scmp.eq.s32.totalorder %s29, 0
      %p82 = por %p80, %p81
      %s83 = ssub.s32 %s23, %s30
      %p84 = scmp.eq.s32.totalorder %s83, 0
      %s86 = sadd.s32 %s85, 1
      %s87 = scalar_select %p84, %s85, %s86
      %p90 = pneg %p84
      %p91 = scmp.eq.s32.totalorder %s23, 1
      %p92 = por %p90, %p91
      %p93 = scmp.ne.s32.totalorder %s85, %s88
      %p94 = scmp.eq.s32.totalorder %s23, 0
      %p95 = por %p93, %p94
      %p96 = scmp.ne.s32.totalorder %s85, %s88
      %p97 = scmp.eq.s32.totalorder %s28, 1
      %p98 = por %p96, %p97
      %p99 = scmp.ne.s32.totalorder %s88, %s89
      %p100 = scmp.eq.s32.totalorder %s28, 0
      %p101 = por %p99, %p100
      %p102 = scmp.ne.s32.totalorder %s88, %s89
      %p103 = scmp.eq.s32.totalorder %s29, 1
      %p104 = por %p102, %p103
      %p106 = scmp.ne.s32.totalorder %s89, %s105
      %p107 = scmp.eq.s32.totalorder %s29, 0
      %p108 = por %p106, %p107
      %s109 = ssub.s32 %s23, %s30
      %p110 = scmp.eq.s32.totalorder %s109, 0
      %s112 = sadd.s32 %s111, 1
      %s113 = scalar_select %p110, %s111, %s112
      %p116 = pneg %p110
      %p117 = scmp.eq.s32.totalorder %s23, 1
      %p118 = por %p116, %p117
      %p119 = scmp.ne.s32.totalorder %s111, %s114
      %p120 = scmp.eq.s32.totalorder %s23, 0
      %p121 = por %p119, %p120
      %p122 = scmp.ne.s32.totalorder %s111, %s114
      %p123 = scmp.eq.s32.totalorder %s28, 1
      %p124 = por %p122, %p123
      %p125 = scmp.ne.s32.totalorder %s114, %s115
      %p126 = scmp.eq.s32.totalorder %s28, 0
      %p127 = por %p125, %p126
      %p128 = scmp.ne.s32.totalorder %s114, %s115
      %p129 = scmp.eq.s32.totalorder %s29, 1
      %p130 = por %p128, %p129
      %p132 = scmp.ne.s32.totalorder %s115, %s131
      %p133 = scmp.eq.s32.totalorder %s29, 0
      %p134 = por %p132, %p133
      %s135 = ssub.s32 %s23, %s30
      %p136 = scmp.eq.s32.totalorder %s135, 0
      %s138 = sadd.s32 %s137, 1
      %s139 = scalar_select %p136, %s137, %s138
      %p142 = pneg %p136
      %p143 = scmp.eq.s32.totalorder %s23, 1
      %p144 = por %p142, %p143
      %p145 = scmp.ne.s32.totalorder %s137, %s140
      %p146 = scmp.eq.s32.totalorder %s23, 0
      %p147 = por %p145, %p146
      %p148 = scmp.ne.s32.totalorder %s137, %s140
      %p149 = scmp.eq.s32.totalorder %s28, 1
      %p150 = por %p148, %p149
      %p151 = scmp.ne.s32.totalorder %s140, %s141
      %p152 = scmp.eq.s32.totalorder %s28, 0
      %p153 = por %p151, %p152
      %p154 = scmp.ne.s32.totalorder %s140, %s141
      %p155 = scmp.eq.s32.totalorder %s29, 1
      %p156 = por %p154, %p155
      %p158 = scmp.ne.s32.totalorder %s141, %s157
      %p159 = scmp.eq.s32.totalorder %s29, 0
      %p160 = por %p158, %p159
      %s161 = ssub.s32 %s23, %s30
      %p162 = scmp.eq.s32.totalorder %s161, 0
      %s164 = sadd.s32 %s163, 1
      %s165 = scalar_select %p162, %s163, %s164
      %p168 = pneg %p162
      %p169 = scmp.eq.s32.totalorder %s23, 1
      %p170 = por %p168, %p169
      %p171 = scmp.ne.s32.totalorder %s163, %s166
      %p172 = scmp.eq.s32.totalorder %s23, 0
      %p173 = por %p171, %p172
      %p174 = scmp.ne.s32.totalorder %s163, %s166
      %p175 = scmp.eq.s32.totalorder %s28, 1
      %p176 = por %p174, %p175
      %p177 = scmp.ne.s32.totalorder %s166, %s167
      %p178 = scmp.eq.s32.totalorder %s28, 0
      %p179 = por %p177, %p178
      %p180 = scmp.ne.s32.totalorder %s166, %s167
      %p181 = scmp.eq.s32.totalorder %s29, 1
      %p182 = por %p180, %p181
      %p184 = scmp.ne.s32.totalorder %s167, %s183
      %p185 = scmp.eq.s32.totalorder %s29, 0
      %p186 = por %p184, %p185
      %s187 = ssub.s32 %s23, %s30
      %p188 = scmp.eq.s32.totalorder %s187, 0
      %s190 = sadd.s32 %s189, 1
      %s191 = scalar_select %p188, %s189, %s190
      %p194 = pneg %p188
      %p195 = scmp.eq.s32.totalorder %s23, 1
      %p196 = por %p194, %p195
      %p197 = scmp.ne.s32.totalorder %s189, %s192
      %p198 = scmp.eq.s32.totalorder %s23, 0
      %p199 = por %p197, %p198
      %p200 = scmp.ne.s32.totalorder %s189, %s192
      %p201 = scmp.eq.s32.totalorder %s28, 1
      %p202 = por %p200, %p201
      %p203 = scmp.ne.s32.totalorder %s192, %s193
      %p204 = scmp.eq.s32.totalorder %s28, 0
      %p205 = por %p203, %p204
      %p206 = scmp.ne.s32.totalorder %s192, %s193
      %p207 = scmp.eq.s32.totalorder %s29, 1
      %p208 = por %p206, %p207
      %p210 = scmp.ne.s32.totalorder %s193, %s209
      %p211 = scmp.eq.s32.totalorder %s29, 0
      %p212 = por %p210, %p211
      %s213 = ssub.s32 %s23, %s30
      %p214 = scmp.eq.s32.totalorder %s213, 0
      %s216 = sadd.s32 %s215, 1
      %s217 = scalar_select %p214, %s215, %s216
      %p220 = pneg %p214
      %p221 = scmp.eq.s32.totalorder %s23, 1
      %p222 = por %p220, %p221
      %p223 = scmp.ne.s32.totalorder %s215, %s218
      %p224 = scmp.eq.s32.totalorder %s23, 0
      %p225 = por %p223, %p224
      %p226 = scmp.ne.s32.totalorder %s215, %s218
      %p227 = scmp.eq.s32.totalorder %s28, 1
      %p228 = por %p226, %p227
      %p229 = scmp.ne.s32.totalorder %s218, %s219
      %p230 = scmp.eq.s32.totalorder %s28, 0
      %p231 = por %p229, %p230
      %p232 = scmp.ne.s32.totalorder %s218, %s219
      %p233 = scmp.eq.s32.totalorder %s29, 1
      %p234 = por %p232, %p233
      %p236 = scmp.ne.s32.totalorder %s219, %s235
      %p237 = scmp.eq.s32.totalorder %s29, 0
      %p238 = por %p236, %p237
      %p239 = scmp.le.s32.totalorder 1, %s23
      %p240 = scmp.lt.s32.totalorder %s23, 3
      %p241 = pnand %p239, %p240
      %p242 = pneg %p241
      // Predicated region
      $region9: #{tpu_custom_call.1} parent=5 // pred_check
        _
      $region10: #{tpu_custom_call.1} parent=5 // pred_check_branch
        %244 = sbr.rel (%p241) target = $region12
      $region11: #{tpu_custom_call.1} parent=5 // pred_region
        %s245 = ssub.s32 %s23, 1
      $region12: #{tpu_custom_call.1} parent=5 // pred_fallthru
        _
      %p246 = scmp.lt.s32.totalorder %s23, 2
      // Predicated region
      $region13: #{tpu_custom_call.1} parent=5 // pred_check
        %p247 = pneg %p246
      $region14: #{tpu_custom_call.1} parent=5 // pred_check_branch
        %249 = sbr.rel (%p247) target = $region16
      $region15: #{tpu_custom_call.1} parent=5 // pred_region
        // Predicated region
        $region17: #{tpu_custom_call.1} parent=15 // pred_check
          %p250 = pneg %p43
        $region18: #{tpu_custom_call.1} parent=15 // pred_check_branch
          %252 = sbr.rel (%p250) target = $region20
        $region19: #{tpu_custom_call.1} parent=15 // pred_region
          %s253 = sand.u32 %s33, 1
          %s254 = scalar_lea.sflag [#allocation3], %s253
          %s255 = sand.u32 %s33, 1
          %s256 = smul.addr %s255, 32
          %s257 = scalar_lea.vmem [#allocation2], %s256
          %s259 = ssub.s32 512, 512
          %260 = vsyncadd %s254, %s259
          %s261 = smul.addr %s23, 128
          %s262 = scalar_lea.hbm %s0, %s261
          %s263 = sshll.u32 %s257, 4
          %s264 = int_to_ptr.vmem [resolvable:$true] %s263
          %269 = dma.hbm_to_vmem [thread:$0]  %s262, 512, %s264, %s254, 256, 128, 8
        $region20: #{tpu_custom_call.1} parent=15 // pred_fallthru
          _
        // Predicated region
        $region21: #{tpu_custom_call.1} parent=15 // pred_check
          %p270 = pneg %p69
        $region22: #{tpu_custom_call.1} parent=15 // pred_check_branch
          %272 = sbr.rel (%p270) target = $region24
        $region23: #{tpu_custom_call.1} parent=15 // pred_region
          %p273 = scmp.lt.s32.totalorder %s23, 1
          %s274 = scalar_select %p273, %s23, 1
          %s275 = scalar_lea.vmem %s1, %s274
        $region24: #{tpu_custom_call.1} parent=15 // pred_fallthru
          _
        // Predicated region
        $region25: #{tpu_custom_call.1} parent=15 // pred_check
          %p276 = pneg %p95
        $region26: #{tpu_custom_call.1} parent=15 // pred_check_branch
          %278 = sbr.rel (%p276) target = $region28
        $region27: #{tpu_custom_call.1} parent=15 // pred_region
          %p279 = scmp.lt.s32.totalorder %s23, 1
          %s280 = scalar_select %p279, %s23, 1
          %s281 = scalar_lea.vmem %s2, %s280
        $region28: #{tpu_custom_call.1} parent=15 // pred_fallthru
          _
        // Predicated region
        $region29: #{tpu_custom_call.1} parent=15 // pred_check
          %p282 = pneg %p121
        $region30: #{tpu_custom_call.1} parent=15 // pred_check_branch
          %284 = sbr.rel (%p282) target = $region32
        $region31: #{tpu_custom_call.1} parent=15 // pred_region
          %p285 = scmp.lt.s32.totalorder %s23, 1
          %s286 = scalar_select %p285, %s23, 1
          %s287 = scalar_lea.vmem %s3, %s286
        $region32: #{tpu_custom_call.1} parent=15 // pred_fallthru
          _
        // Predicated region
        $region33: #{tpu_custom_call.1} parent=15 // pred_check
          %p288 = pneg %p147
        $region34: #{tpu_custom_call.1} parent=15 // pred_check_branch
          %290 = sbr.rel (%p288) target = $region36
        $region35: #{tpu_custom_call.1} parent=15 // pred_region
          %p291 = scmp.lt.s32.totalorder %s23, 1
          %s292 = scalar_select %p291, %s23, 1
          %s293 = scalar_lea.vmem %s4, %s292
        $region36: #{tpu_custom_call.1} parent=15 // pred_fallthru
          _
      $region16: #{tpu_custom_call.1} parent=5 // pred_fallthru
        _
      %p294 = scmp.le.s32.totalorder 1, %s23
      %p295 = scmp.lt.s32.totalorder %s23, 3
      %p296 = pnand %p294, %p295
      %p297 = pneg %p296
      // Predicated region
      $region37: #{tpu_custom_call.1} parent=5 // pred_check
        _
      $region38: #{tpu_custom_call.1} parent=5 // pred_check_branch
        %299 = sbr.rel (%p296) target = $region40
      $region39: #{tpu_custom_call.1} parent=5 // pred_region
        %s300 = ssub.s32 %s23, 1
        %s301 = sand.u32 %s36, 1
        %s302 = scalar_lea.sflag [#allocation3], %s301
        %s303 = sand.u32 %s36, 1
        %s304 = smul.addr %s303, 32
        %s305 = scalar_lea.vmem [#allocation2], %s304
        // Predicated region
        $region41: #{tpu_custom_call.1} parent=39 // pred_check
          %p306 = pneg %p49
        $region42: #{tpu_custom_call.1} parent=39 // pred_check_branch
          %308 = sbr.rel (%p306) target = $region44
        $region43: #{tpu_custom_call.1} parent=39 // pred_region
          %309 = dma.done %s302, 512
        $region44: #{tpu_custom_call.1} parent=39 // pred_fallthru
          _
        %s310 = sand.u32 %s36, 1
        %s311 = scalar_lea.sflag [#allocation3], %s310
        %s312 = sand.u32 %s36, 1
        %s313 = smul.addr %s312, 32
        %s314 = scalar_lea.vmem [#allocation2], %s313
        %p315 = pneg %p49
        %p316 = pneg %p46
        %p317 = scmp.lt.s32.totalorder %s28, 1
        %s318 = scalar_select %p317, %s28, 1
        %s319 = scalar_lea.vmem %s1, %s318
        %p320 = pneg %p75
        %p321 = pneg %p72
        %p322 = scmp.lt.s32.totalorder %s28, 1
        %s323 = scalar_select %p322, %s28, 1
        %s324 = scalar_lea.vmem %s2, %s323
        %p325 = pneg %p101
        %p326 = pneg %p98
        %p327 = scmp.lt.s32.totalorder %s28, 1
        %s328 = scalar_select %p327, %s28, 1
        %s329 = scalar_lea.vmem %s3, %s328
        %p330 = pneg %p127
        %p331 = pneg %p124
        %p332 = scmp.lt.s32.totalorder %s28, 1
        %s333 = scalar_select %p332, %s28, 1
        %s334 = scalar_lea.vmem %s4, %s333
        %p335 = pneg %p153
        %p336 = pneg %p150
        %p337 = pneg %p179
        %p338 = pneg %p176
        %s339 = sand.u32 %s166, 1
        %s340 = scalar_lea.sflag [#allocation4], %s339
        %s341 = sand.u32 %s166, 1
        %s342 = smul.addr %s341, 32
        %s343 = scalar_lea.vmem [#allocation5], %s342
        %p344 = pneg %p205
        %p345 = pneg %p202
        %s346 = sand.u32 %s28, 1
        %s347 = scalar_lea.sflag [#allocation7], %s346
        %s348 = sand.u32 %s192, 1
        %s349 = scalar_lea.vmem [#allocation6], %s348
        %p350 = pneg %p231
        %p351 = pneg %p228
        %s352 = sand.u32 %s28, 1
        %s353 = scalar_lea.sflag [#allocation7], %s352
        %s354 = sand.u32 %s218, 1
        %s355 = scalar_lea.vmem [#allocation8], %s354
        %p356 = scmp.lt.s32.totalorder %s28, 1
        %s357 = scalar_select %p356, %s28, 1
        %s358 = scalar_lea.vmem %s1, %s357
        %p359 = scmp.lt.s32.totalorder %s28, 1
        %s360 = scalar_select %p359, %s28, 1
        %s361 = scalar_lea.vmem %s2, %s360
        %p362 = scmp.lt.s32.totalorder %s28, 1
        %s363 = scalar_select %p362, %s28, 1
        %s364 = scalar_lea.vmem %s3, %s363
        %p365 = scmp.lt.s32.totalorder %s28, 1
        %s366 = scalar_select %p365, %s28, 1
        %s367 = scalar_lea.vmem %s4, %s366
        %v368 = vld [vmem:[%s305] sm:$0xff]
        %v369 = vld [vmem:[%s305 + $0x8] sm:$0xff]
        %v370 = vld [vmem:[%s305 + $0x10] sm:$0xff]
        %v371 = vld [vmem:[%s305 + $0x18] sm:$0xff]
        %v372 = vadd.f32 %v368, %v369
        %v373 = vadd.f32 %v372, %v370
        %v374 = vadd.f32 %v373, %v371
        %v375 = vrot.slane %v374, 4
        %v376 = vadd.f32 %v374, %v375
        %v377 = vrot.slane %v376, 2
        %v378 = vadd.f32 %v376, %v377
        %v379 = vrot.slane %v378, 1
        %v380 = vadd.f32 %v378, %v379
        %v381 = vmul.f32 %v380, 0.03125
        %v382 = vsub.f32 %v368, %v381
        %v383 = vsub.f32 %v369, %v381
        %v384 = vsub.f32 %v370, %v381
        %v385 = vsub.f32 %v371, %v381
        %v386 = vmul.f32 %v382, %v382
        %v387 = vmul.f32 %v383, %v383
        %v388 = vmul.f32 %v384, %v384
        %v389 = vmul.f32 %v385, %v385
        %v390 = vadd.f32 %v386, %v387
        %v391 = vadd.f32 %v390, %v388
        %v392 = vadd.f32 %v391, %v389
        %v393 = vrot.slane %v392, 4
        %v394 = vadd.f32 %v392, %v393
        %v395 = vrot.slane %v394, 2
        %v396 = vadd.f32 %v394, %v395
        %v397 = vrot.slane %v396, 1
        %v398 = vadd.f32 %v396, %v397
        %v399 = vmul.f32 %v398, 0.032258064
        %v400 = vadd.f32 %v399, 1e-05
        %v401 = vrsqrt.pop %v400
        %v402 = vld [vmem:[%s358] sm:$0x1]
        %v403 = vmul.f32 %v402, %v401
        %v405 = vlaneseq
        %v406 = vshrl.u32 %v405, 7
        %v407 = vsub.s32 0, %v406
        %v408 = vrot.slane %v403, %v407
        %v410 = vmul.f32 %v382, %v408
        %v411 = vmul.f32 %v383, %v408
        %v412 = vmul.f32 %v384, %v408
        %v413 = vmul.f32 %v385, %v408
        %v414 = vld [vmem:[%s361] sm:$0x1]
        %v416 = vlaneseq
        %v417 = vshrl.u32 %v416, 7
        %v418 = vsub.s32 0, %v417
        %v419 = vrot.slane %v414, %v418
        %v421 = vadd.f32 %v410, %v419
        %v422 = vadd.f32 %v411, %v419
        %v423 = vadd.f32 %v412, %v419
        %v424 = vadd.f32 %v413, %v419
        %425 = vst [vmem:[%s343] sm:$0xff] %v421
        %426 = vst [vmem:[%s343 + $0x8] sm:$0xff] %v422
        %427 = vst [vmem:[%s343 + $0x10] sm:$0xff] %v423
        %428 = vst [vmem:[%s343 + $0x18] sm:$0xff] %v424
        %v429 = vld [vmem:[%s364] sm:$0x1]
        %v430 = vmul.f32 %v429, 0.9
        %v431 = vmul.f32 %v381, 0.1
        %v432 = vadd.f32 %v430, %v431
        %433 = vst [vmem:[%s349] sm:$0x1] %v432
        %v434 = vld [vmem:[%s367] sm:$0x1]
        %v435 = vmul.f32 %v434, 0.9
        %v436 = vmul.f32 %v399, 0.1
        %v437 = vadd.f32 %v435, %v436
        %438 = vst [vmem:[%s355] sm:$0x1] %v437
        %s439 = sand.u32 %s166, 1
        %s440 = scalar_lea.sflag [#allocation4], %s439
        %s441 = sand.u32 %s166, 1
        %s442 = smul.addr %s441, 32
        %s443 = scalar_lea.vmem [#allocation5], %s442
        %s444 = sand.u32 %s28, 1
        %s445 = scalar_lea.sflag [#allocation7], %s444
        %s446 = sand.u32 %s192, 1
        %s447 = scalar_lea.vmem [#allocation6], %s446
        %s448 = sand.u32 %s28, 1
        %s449 = scalar_lea.sflag [#allocation7], %s448
        %s450 = sand.u32 %s218, 1
        %s451 = scalar_lea.vmem [#allocation8], %s450
        // Predicated region
        $region45: #{tpu_custom_call.1} parent=39 // pred_check
          %p452 = pneg %p176
        $region46: #{tpu_custom_call.1} parent=39 // pred_check_branch
          %454 = sbr.rel (%p452) target = $region48
        $region47: #{tpu_custom_call.1} parent=39 // pred_region
          %s456 = ssub.s32 512, 512
          %457 = vsyncadd %s440, %s456
          %s458 = smul.addr %s28, 128
          %s459 = scalar_lea.hbm %s5, %s458
          %s460 = sshll.u32 %s443, 4
          %s461 = int_to_ptr.vmem [resolvable:$true] %s460
          %466 = dma.vmem_to_hbm [thread:$0]  %s461, 512, %s459, %s440, 128, 256, 8
        $region48: #{tpu_custom_call.1} parent=39 // pred_fallthru
          _
        // Predicated region
        $region49: #{tpu_custom_call.1} parent=39 // pred_check
          %p467 = pneg %p202
        $region50: #{tpu_custom_call.1} parent=39 // pred_check_branch
          %469 = sbr.rel (%p467) target = $region52
        $region51: #{tpu_custom_call.1} parent=39 // pred_region
          %s471 = ssub.s32 16, 16
          %472 = vsyncadd %s445, %s471
          %s473 = smul.addr %s28, 16
          %s474 = scalar_lea.hbm %s6, %s473
          %s476 = sshll.u32 %s447, 4
          %s477 = int_to_ptr.vmem [resolvable:$true] %s476
          %479 = dma.vmem_to_hbm [thread:$0]  %s477, 16, %s474, %s445
        $region52: #{tpu_custom_call.1} parent=39 // pred_fallthru
          _
        // Predicated region
        $region53: #{tpu_custom_call.1} parent=39 // pred_check
          %p480 = pneg %p228
        $region54: #{tpu_custom_call.1} parent=39 // pred_check_branch
          %482 = sbr.rel (%p480) target = $region56
        $region55: #{tpu_custom_call.1} parent=39 // pred_region
          %s484 = ssub.s32 16, 16
          %485 = vsyncadd %s449, %s484
          %s486 = smul.addr %s28, 16
          %s487 = scalar_lea.hbm %s7, %s486
          %s489 = sshll.u32 %s451, 4
          %s490 = int_to_ptr.vmem [resolvable:$true] %s489
          %492 = dma.vmem_to_hbm [thread:$0]  %s490, 16, %s487, %s449
        $region56: #{tpu_custom_call.1} parent=39 // pred_fallthru
          _
      $region40: #{tpu_custom_call.1} parent=5 // pred_fallthru
        _
      %p493 = scmp.le.s32.totalorder 2, %s23
      // Predicated region
      $region57: #{tpu_custom_call.1} parent=5 // pred_check
        %p494 = pneg %p493
      $region58: #{tpu_custom_call.1} parent=5 // pred_check_branch
        %496 = sbr.rel (%p494) target = $region60
      $region59: #{tpu_custom_call.1} parent=5 // pred_region
        %s497 = ssub.s32 %s23, 2
        // Predicated region
        $region61: #{tpu_custom_call.1} parent=59 // pred_check
          %p498 = pneg %p182
        $region62: #{tpu_custom_call.1} parent=59 // pred_check_branch
          %500 = sbr.rel (%p498) target = $region64
        $region63: #{tpu_custom_call.1} parent=59 // pred_region
          %s501 = sand.u32 %s167, 1
          %s502 = scalar_lea.sflag [#allocation4], %s501
          %s503 = sand.u32 %s167, 1
          %s504 = smul.addr %s503, 32
          %s505 = scalar_lea.vmem [#allocation5], %s504
          %506 = dma.done %s502, 512
        $region64: #{tpu_custom_call.1} parent=59 // pred_fallthru
          _
        // Predicated region
        $region65: #{tpu_custom_call.1} parent=59 // pred_check
          %p507 = pneg %p208
        $region66: #{tpu_custom_call.1} parent=59 // pred_check_branch
          %509 = sbr.rel (%p507) target = $region68
        $region67: #{tpu_custom_call.1} parent=59 // pred_region
          %s510 = sand.u32 %s29, 1
          %s511 = scalar_lea.sflag [#allocation7], %s510
          %s512 = sand.u32 %s193, 1
          %s513 = scalar_lea.vmem [#allocation6], %s512
          %514 = dma.done %s511, 16
        $region68: #{tpu_custom_call.1} parent=59 // pred_fallthru
          _
        // Predicated region
        $region69: #{tpu_custom_call.1} parent=59 // pred_check
          %p515 = pneg %p234
        $region70: #{tpu_custom_call.1} parent=59 // pred_check_branch
          %517 = sbr.rel (%p515) target = $region72
        $region71: #{tpu_custom_call.1} parent=59 // pred_region
          %s518 = sand.u32 %s29, 1
          %s519 = scalar_lea.sflag [#allocation7], %s518
          %s520 = sand.u32 %s219, 1
          %s521 = scalar_lea.vmem [#allocation8], %s520
          %522 = dma.done %s519, 16
        $region72: #{tpu_custom_call.1} parent=59 // pred_fallthru
          _
      $region60: #{tpu_custom_call.1} parent=5 // pred_fallthru
        _
    $region6: #{tpu_custom_call.1} parent=1 // loop_footer
      %s27 = sadd.s32 1, %s23
    $region7: #{tpu_custom_call.1} parent=1 // loop_footer_branch
      %22 = sbr.rel target = $region3
    $region8: #{tpu_custom_call.1} parent=1 // loop_exit
      _
    %523 = vsyncpa [#allocation3], 1
    %s524 = scalar_lea.sflag [#allocation3], 1
    %525 = vsyncpa %s524, 1
    %526 = vsyncpa [#allocation4], 1
    %s527 = scalar_lea.sflag [#allocation4], 1
    %528 = vsyncpa %s527, 1
    %529 = vsyncpa [#allocation7], 1
    %s530 = scalar_lea.sflag [#allocation7], 1
    %531 = vsyncpa %s530, 1

</llo_original>
